<compile_context>
chip_gen: v5e
topology: v5e:2x2
jax: 0.10.0
libtpu: 0.0.40
codegen_flags: <defaults>
</compile_context>

<pallas_src>
import jax
import jax.numpy as jnp
from jax.experimental import pallas as pl
from jax.experimental.pallas import tpu as pltpu

_LANES = 128
_SUBLANES = 8
_TILE = _LANES * _SUBLANES  # 1024 f32 elements = one vreg tile


def _identity_kernel(x_ref, o_ref):
    # Whole-tile load + store; pure VPU pass-through.
    o_ref[...] = x_ref[...]


def pallas_identity(x: jax.Array) -> jax.Array:
    """Identity copy of `x` via a minimal, gridless Pallas TPU kernel."""
    n = x.size
    n_pad = ((n + _TILE - 1) // _TILE) * _TILE  # pad to a clean (8,128) tile count

    flat = x.reshape(-1)
    if n_pad != n:
        flat = jnp.pad(flat, (0, n_pad - n))
    rows = n_pad // _LANES
    x2d = flat.reshape(rows, _LANES)  # lane-dense slab: last dim = 128 lanes

    out2d = pl.pallas_call(
        _identity_kernel,
        out_shape=jax.ShapeDtypeStruct((rows, _LANES), x.dtype),
        # Gridless form: one DMA in, one DMA out, no per-step grid bookkeeping.
        in_specs=[pl.BlockSpec(memory_space=pltpu.MemorySpace.VMEM)],
        out_specs=pl.BlockSpec(memory_space=pltpu.MemorySpace.VMEM),
        # P8: alias output HBM buffer onto the input slab (in-place writeback).
        input_output_aliases={0: 0},
    )(x2d)

    return out2d.reshape(-1)[:n].reshape(x.shape)


# jit so the pad/reshape plumbing fuses around the single pallas custom call.
_pallas_identity_jit = jax.jit(pallas_identity)


def encoder_forward(x: jax.Array):
    """Equivalent of Encoder.forward: the PyTorch body is `pass` -> None.

    Per the perf review, no kernel is launched here — the reference forward
    does no work and returns None, so the fastest correct implementation is
    to do nothing on device.
    """
    # TODO(synk): reference forward body is empty (`pass`); no conv/matmul/
    # reduction exists to port. If a real CAE encoder body is added, tile it
    # with 512–1024-wide lane-dense blocks and MXU-aligned (128,*)x(*,128)
    # matmul tiles, keeping double-buffered VMEM under ~32 MiB for v7x.
    del x
    return None


if __name__ == "__main__":
    key = jax.random.PRNGKey(0)
    # NCHW input consistent with a CAE encoder's expected image input.
    x = jax.random.normal(key, (2, 4, 16, 16), dtype=jnp.float32)

    # Demo / validation of the Pallas plumbing (not part of the module path).
    y = _pallas_identity_jit(x)
    jax.block_until_ready(y)
    assert y.shape == x.shape and y.dtype == x.dtype
    assert bool(jnp.allclose(y, x)), "identity kernel mismatch"

    # Non-128-divisible element count also works now (padding path).
    x_odd = jax.random.normal(key, (3, 5, 7), dtype=jnp.float32)
    y_odd = _pallas_identity_jit(x_odd)
    jax.block_until_ready(y_odd)
    assert bool(jnp.allclose(y_odd, x_odd)), "padded identity kernel mismatch"

    # Module-level semantics: forward(x) returns None, exactly like PyTorch,
    # and launches no device work.
    out = encoder_forward(x)
    assert out is None

    print("KERNEL_OK")
</pallas_src>

<mosaic_0001>
module attributes {stable_mosaic.version = 11 : i64} {
  func.func @_identity_kernel(%arg0: memref<16x128xf32, #tpu.memory_space<vmem>>, %arg1: memref<16x128xf32, #tpu.memory_space<vmem>>) attributes {dimension_semantics = [], scalar_prefetch = 0 : i64, scratch_operands = 0 : i64, tpu.core_type = #tpu.core_type<tc>} {
    %c0 = arith.constant 0 : index
    %c0_0 = arith.constant 0 : index
    %0 = vector.load %arg0[%c0, %c0_0] : memref<16x128xf32, #tpu.memory_space<vmem>>, vector<16x128xf32>
    %c0_1 = arith.constant 0 : index
    %c0_2 = arith.constant 0 : index
    %1 = vector.load %arg1[%c0_1, %c0_2] : memref<16x128xf32, #tpu.memory_space<vmem>>, vector<16x128xf32>
    tpu.vector_store %arg1[%c0_1, %c0_2], %0 {strides = array<i32>} : memref<16x128xf32, #tpu.memory_space<vmem>>, vector<16x128xf32>,
    return
  }
}

</mosaic_0001>

<llo_original>
// kernel: pallas_identity.1
$region0: #{pallas_identity.1}
  #allocation0 [shape = 'u32[]', space=smem, size = 0x4, offset = 0x4, fixed_abs, tag = 'smem constant byte address 0x4 - core index']
  #allocation1 [shape = 'u32[72,128]{1,0:T(1,128)}', space=vmem, size = 0x9000, scoped, tag = 'internal scratch']
  %s0 = inlined_call_operand.vmem [shape: f32[16,128], index: 0, kind: input, shape index: {}, may-alias: {0,1}]
  %s1 = inlined_call_operand.vmem [shape: f32[16,128], index: 1, kind: output, shape index: {}, may-alias: {0,1}]
  %s2 = sld [smem:[#allocation0]]
  $region14: #{pallas_identity.1} parent=0
    _
  %s4 = ssub.s32 1, %s2
  %s5 = scalar_select 0, %s4, %s2
  // Predicated region
  $region2: #{pallas_identity.1} parent=0 // pred_check
    _
  $region3: #{pallas_identity.1} parent=0 // pred_check_branch
    %7 = sbr.rel (0) target = $region5
  $region4: #{pallas_identity.1} parent=0 // pred_region
    _
  $region5: #{pallas_identity.1} parent=0 // pred_fallthru
    _
  %v8 = vld [vmem:[%s0] sm:$0xff]
  %v9 = vld [vmem:[%s0 + $0x8] sm:$0xff]
  %10 = vst [vmem:[%s1] sm:$0xff] %v8
  %11 = vst [vmem:[%s1 + $0x8] sm:$0xff] %v9
  // Predicated region
  $region6: #{pallas_identity.1} parent=0 // pred_check
    _
  $region7: #{pallas_identity.1} parent=0 // pred_check_branch
    %13 = sbr.rel (0) target = $region9
  $region8: #{pallas_identity.1} parent=0 // pred_region
    _
  $region9: #{pallas_identity.1} parent=0 // pred_fallthru
    _
  // Predicated region
  $region10: #{pallas_identity.1} parent=0 // pred_check
    _
  $region11: #{pallas_identity.1} parent=0 // pred_check_branch
    %15 = sbr.rel (0) target = $region13
  $region12: #{pallas_identity.1} parent=0 // pred_region
    _
  $region13: #{pallas_identity.1} parent=0 // pred_fallthru
    _

</llo_original>
